<compile_context>
chip_gen: v7x
topology: tpu7x:2x2x1
jax: 0.10.0
libtpu: 0.0.40
codegen_flags: <defaults>
</compile_context>

<pallas_src>
import jax
import jax.numpy as jnp
from jax.experimental import pallas as pl
from jax.experimental.pallas import tpu as pltpu

NOISE_DIM = 256
LABEL_DIM = 5
HIDDEN = 512
BN_EPS = 1e-5


def _generator_kernel(noise_ref, labels_ref, wn_ref, wl_ref, gamma_ref, beta_ref, out_ref):
    # noise_ref:  [B, NOISE_DIM]   f32
    # labels_ref: [B, LABEL_DIM]   f32
    # wn_ref:     [NOISE_DIM, HIDDEN] bf16  (persisted; W rows for noise features)
    # wl_ref:     [LABEL_DIM, HIDDEN] f32   (tiny; used on the VPU path)
    # gamma_ref:  [1, HIDDEN] f32  batchnorm weight
    # beta_ref:   [1, HIDDEN] f32  batchnorm bias
    # out_ref:    [B, HIDDEN] int32
    B = noise_ref.shape[0]

    # Dominant matmul on the MXU: bf16 inputs, f32 accumulation. K=256 stays
    # perfectly lane-aligned (no 261->264/384 padding feeding the MXU).
    h = jnp.dot(noise_ref[...].astype(jnp.bfloat16), wn_ref[...],
                preferred_element_type=jnp.float32)

    # Label contribution (K=5): statically unrolled VPU broadcast multiply-adds
    # instead of a second, heavily padded MXU push.
    labels = labels_ref[...]
    wl = wl_ref[...]
    for c in range(LABEL_DIM):
        h = h + labels[:, c:c + 1] * wl[c:c + 1, :]
    # (Linear bias intentionally omitted: exactly cancelled by the train-mode
    #  BatchNorm mean subtraction below.)

    # BatchNorm1d, training-mode batch stats, one pass:
    # the two axis=0 (sublane) reductions are independent XLU ops.
    inv_b = 1.0 / B
    s1 = jnp.sum(h, axis=0, keepdims=True)
    s2 = jnp.sum(h * h, axis=0, keepdims=True)
    mean = s1 * inv_b
    var = s2 * inv_b - mean * mean
    scale = gamma_ref[...] * jax.lax.rsqrt(var + BN_EPS)   # gamma folded into scale
    shift = beta_ref[...] - mean * scale                   # beta folded into shift
    bn = h * scale + shift                                 # single full-width FMA-ish pass

    # Tanh (EUP), abs, truncate toward zero (torch .long(); int32 on TPU).
    out_ref[...] = jnp.abs(jnp.tanh(bn)).astype(jnp.int32)


def prepare_generator_params(w, b, gamma, beta):
    """One-time parameter conversion. Persist the returned arrays across calls
    so the per-call HBM traffic is just the ~270 KB bf16 weight read (the old
    per-call recast read the f32 weight AND wrote/read a bf16 copy every call).

    w:     [NOISE_DIM + LABEL_DIM, HIDDEN] f32  (Linear weight, [in, out])
    b:     [HIDDEN] f32 (Linear bias; exact no-op under train-mode BatchNorm)
    gamma: [HIDDEN] f32 (BatchNorm1d weight)
    beta:  [HIDDEN] f32 (BatchNorm1d bias)
    """
    del b  # cancelled exactly by the train-mode BN mean subtraction
    w_noise = jnp.asarray(w[:NOISE_DIM], dtype=jnp.bfloat16)   # [256, 512] bf16 (MXU)
    w_label = jnp.asarray(w[NOISE_DIM:], dtype=jnp.float32)    # [5, 512]   f32  (VPU)
    gamma2 = jnp.asarray(gamma, dtype=jnp.float32).reshape(1, HIDDEN)
    beta2 = jnp.asarray(beta, dtype=jnp.float32).reshape(1, HIDDEN)
    return w_noise, w_label, gamma2, beta2


@jax.jit
def generator_noise_proj(noise, labels, w_noise, w_label, gamma2, beta2):
    """Pallas kernel call for Generator.noise_proj + abs().long().

    noise:   [B, NOISE_DIM] f32
    labels:  [B, LABEL_DIM] f32
    w_noise: [NOISE_DIM, HIDDEN] bf16   (from prepare_generator_params)
    w_label: [LABEL_DIM, HIDDEN] f32    (from prepare_generator_params)
    gamma2:  [1, HIDDEN] f32
    beta2:   [1, HIDDEN] f32
    returns  [B, HIDDEN] int32
    """
    B = noise.shape[0]
    return pl.pallas_call(
        _generator_kernel,
        out_shape=jax.ShapeDtypeStruct((B, HIDDEN), jnp.int32),
        grid=(1,),
        in_specs=[
            pl.BlockSpec((B, NOISE_DIM), lambda i: (0, 0)),
            pl.BlockSpec((B, LABEL_DIM), lambda i: (0, 0)),
            pl.BlockSpec((NOISE_DIM, HIDDEN), lambda i: (0, 0)),
            pl.BlockSpec((LABEL_DIM, HIDDEN), lambda i: (0, 0)),
            pl.BlockSpec((1, HIDDEN), lambda i: (0, 0)),
            pl.BlockSpec((1, HIDDEN), lambda i: (0, 0)),
        ],
        out_specs=pl.BlockSpec((B, HIDDEN), lambda i: (0, 0)),
        compiler_params=pltpu.CompilerParams(
            dimension_semantics=("arbitrary",),
        ),
    )(noise, labels, w_noise, w_label, gamma2, beta2)


def _reference(noise, labels, w, b, gamma, beta):
    # Faithful f32 mirror of the PyTorch module (bias included, two-pass BN).
    x = jnp.concatenate([noise, labels], axis=1)
    h = x @ w + b
    mean = jnp.mean(h, axis=0, keepdims=True)
    var = jnp.mean((h - mean) ** 2, axis=0, keepdims=True)
    bn = gamma * (h - mean) / jnp.sqrt(var + BN_EPS) + beta
    y = jnp.tanh(bn)
    return jnp.abs(y).astype(jnp.int32)


if __name__ == "__main__":
    key = jax.random.PRNGKey(0)
    k_noise, k_labels, k_w, k_b, k_gamma = jax.random.split(key, 5)

    B = 8  # small batch
    noise = jax.random.normal(k_noise, (B, NOISE_DIM), dtype=jnp.float32)
    # one-hot style labels (float, as they are concatenated with the noise)
    label_ids = jax.random.randint(k_labels, (B,), 0, LABEL_DIM)
    labels = jax.nn.one_hot(label_ids, LABEL_DIM, dtype=jnp.float32)

    # Linear(261, 512) init (nn.Linear-like scale) + BatchNorm1d(512) params.
    fan_in = NOISE_DIM + LABEL_DIM
    bound = 1.0 / (fan_in ** 0.5)
    w = jax.random.uniform(k_w, (fan_in, HIDDEN), jnp.float32, -bound, bound)
    b = jax.random.uniform(k_b, (HIDDEN,), jnp.float32, -bound, bound)

    # ---- Test 1: default BatchNorm init (gamma=1, beta=0). -------------------
    # abs(tanh(bn)) < 1 everywhere (BN output bounded by sqrt(B-1) ~ 2.65), so
    # truncation gives all zeros -- matches torch semantics exactly.
    gamma1 = jnp.ones((HIDDEN,), jnp.float32)
    beta1 = jnp.zeros((HIDDEN,), jnp.float32)
    wn, wl, g2, bt2 = prepare_generator_params(w, b, gamma1, beta1)
    out1 = jax.block_until_ready(generator_noise_proj(noise, labels, wn, wl, g2, bt2))
    ref1 = _reference(noise, labels, w, b, gamma1, beta1)
    assert out1.shape == (B, HIDDEN) and out1.dtype == jnp.int32
    assert bool(jnp.all(out1 == ref1))
    assert bool(jnp.all(out1 == 0))  # documented degenerate behaviour of abs(tanh).long()

    # ---- Test 2: non-default gamma/beta that exercise both 0 and 1 outputs. --
    # beta alternates {0, 20}: columns with beta=20 land far past tanh saturation
    # (bn >= 20 - 1.5*2.65 ~ 16 -> tanh == 1.0 exactly), columns with beta=0 stay
    # well below it (|bn| <= ~4 -> tanh < 1). Both regimes are far from the
    # saturation boundary, so the bf16-matmul kernel matches the f32 reference
    # exactly after integer truncation.
    gamma2v = jax.random.uniform(k_gamma, (HIDDEN,), jnp.float32, 0.5, 1.5)
    beta2v = jnp.where(jnp.arange(HIDDEN) % 2 == 0, 0.0, 20.0).astype(jnp.float32)
    _, _, g2b, bt2b = prepare_generator_params(w, b, gamma2v, beta2v)
    out2 = jax.block_until_ready(generator_noise_proj(noise, labels, wn, wl, g2b, bt2b))
    ref2 = _reference(noise, labels, w, b, gamma2v, beta2v)
    assert bool(jnp.all(out2 == ref2))
    assert bool(jnp.any(out2 == 1)) and bool(jnp.any(out2 == 0))  # non-trivial output

    print("KERNEL_OK")
</pallas_src>

<mosaic_0001>
module attributes {stable_mosaic.version = 11 : i64} {
  func.func @_generator_kernel(%arg0: i32, %arg1: memref<8x256xf32, #tpu.memory_space<vmem>>, %arg2: memref<8x5xf32, #tpu.memory_space<vmem>>, %arg3: memref<256x512xbf16, #tpu.memory_space<vmem>>, %arg4: memref<5x512xf32, #tpu.memory_space<vmem>>, %arg5: memref<1x512xf32, #tpu.memory_space<vmem>>, %arg6: memref<1x512xf32, #tpu.memory_space<vmem>>, %arg7: memref<8x512xi32, #tpu.memory_space<vmem>>) attributes {dimension_semantics = [#tpu.dimension_semantics<arbitrary>], iteration_bounds = array<i64: 1>, scalar_prefetch = 0 : i64, scratch_operands = 0 : i64, tpu.core_type = #tpu.core_type<tc>, window_params = [{pipeline_mode = #tpu.pipeline_mode<synchronous>, transform_indices = @transform_0, window_bounds = array<i64: 8, 256>}, {pipeline_mode = #tpu.pipeline_mode<synchronous>, transform_indices = @transform_1, window_bounds = array<i64: 8, 5>}, {pipeline_mode = #tpu.pipeline_mode<synchronous>, transform_indices = @transform_2, window_bounds = array<i64: 256, 512>}, {pipeline_mode = #tpu.pipeline_mode<synchronous>, transform_indices = @transform_3, window_bounds = array<i64: 5, 512>}, {pipeline_mode = #tpu.pipeline_mode<synchronous>, transform_indices = @transform_4, window_bounds = array<i64: 1, 512>}, {pipeline_mode = #tpu.pipeline_mode<synchronous>, transform_indices = @transform_5, window_bounds = array<i64: 1, 512>}, {pipeline_mode = #tpu.pipeline_mode<synchronous>, transform_indices = @transform_6, window_bounds = array<i64: 8, 512>}]} {
    %c0 = arith.constant 0 : index
    %c0_0 = arith.constant 0 : index
    %0 = vector.load %arg1[%c0, %c0_0] : memref<8x256xf32, #tpu.memory_space<vmem>>, vector<8x256xf32>
    %1 = arith.truncf %0 : vector<8x256xf32> to vector<8x256xbf16>
    %c0_1 = arith.constant 0 : index
    %c0_2 = arith.constant 0 : index
    %2 = vector.load %arg3[%c0_1, %c0_2] : memref<256x512xbf16, #tpu.memory_space<vmem>>, vector<256x512xbf16>
    %cst = arith.constant dense<0.000000e+00> : vector<8x512xf32>
    %3 = tpu.matmul %1, %2, %cst {dimension_numbers = #tpu.dot_dimension_numbers<[1], [0], [0], [1], [0, 0, 1, 1], [], []>} : vector<8x256xbf16>, vector<256x512xbf16>, vector<8x512xf32> -> vector<8x512xf32>
    %c0_3 = arith.constant 0 : index
    %c0_4 = arith.constant 0 : index
    %4 = vector.load %arg2[%c0_3, %c0_4] : memref<8x5xf32, #tpu.memory_space<vmem>>, vector<8x5xf32>
    %c0_5 = arith.constant 0 : index
    %c0_6 = arith.constant 0 : index
    %5 = vector.load %arg4[%c0_5, %c0_6] : memref<5x512xf32, #tpu.memory_space<vmem>>, vector<5x512xf32>
    %6 = vector.extract_strided_slice %4 {offsets = [0, 0], sizes = [8, 1], strides = [1, 1]} : vector<8x5xf32> to vector<8x1xf32>
    %7 = vector.extract_strided_slice %5 {offsets = [0, 0], sizes = [1, 512], strides = [1, 1]} : vector<5x512xf32> to vector<1x512xf32>
    %8 = vector.broadcast %6 : vector<8x1xf32> to vector<8x512xf32>
    %9 = vector.broadcast %7 : vector<1x512xf32> to vector<8x512xf32>
    %10 = arith.mulf %8, %9 : vector<8x512xf32>
    %11 = arith.addf %3, %10 : vector<8x512xf32>
    %12 = vector.extract_strided_slice %4 {offsets = [0, 1], sizes = [8, 1], strides = [1, 1]} : vector<8x5xf32> to vector<8x1xf32>
    %13 = vector.extract_strided_slice %5 {offsets = [1, 0], sizes = [1, 512], strides = [1, 1]} : vector<5x512xf32> to vector<1x512xf32>
    %14 = vector.broadcast %12 : vector<8x1xf32> to vector<8x512xf32>
    %15 = vector.broadcast %13 : vector<1x512xf32> to vector<8x512xf32>
    %16 = arith.mulf %14, %15 : vector<8x512xf32>
    %17 = arith.addf %11, %16 : vector<8x512xf32>
    %18 = vector.extract_strided_slice %4 {offsets = [0, 2], sizes = [8, 1], strides = [1, 1]} : vector<8x5xf32> to vector<8x1xf32>
    %19 = vector.extract_strided_slice %5 {offsets = [2, 0], sizes = [1, 512], strides = [1, 1]} : vector<5x512xf32> to vector<1x512xf32>
    %20 = vector.broadcast %18 : vector<8x1xf32> to vector<8x512xf32>
    %21 = vector.broadcast %19 : vector<1x512xf32> to vector<8x512xf32>
    %22 = arith.mulf %20, %21 : vector<8x512xf32>
    %23 = arith.addf %17, %22 : vector<8x512xf32>
    %24 = vector.extract_strided_slice %4 {offsets = [0, 3], sizes = [8, 1], strides = [1, 1]} : vector<8x5xf32> to vector<8x1xf32>
    %25 = vector.extract_strided_slice %5 {offsets = [3, 0], sizes = [1, 512], strides = [1, 1]} : vector<5x512xf32> to vector<1x512xf32>
    %26 = vector.broadcast %24 : vector<8x1xf32> to vector<8x512xf32>
    %27 = vector.broadcast %25 : vector<1x512xf32> to vector<8x512xf32>
    %28 = arith.mulf %26, %27 : vector<8x512xf32>
    %29 = arith.addf %23, %28 : vector<8x512xf32>
    %30 = vector.extract_strided_slice %4 {offsets = [0, 4], sizes = [8, 1], strides = [1, 1]} : vector<8x5xf32> to vector<8x1xf32>
    %31 = vector.extract_strided_slice %5 {offsets = [4, 0], sizes = [1, 512], strides = [1, 1]} : vector<5x512xf32> to vector<1x512xf32>
    %32 = vector.broadcast %30 : vector<8x1xf32> to vector<8x512xf32>
    %33 = vector.broadcast %31 : vector<1x512xf32> to vector<8x512xf32>
    %34 = arith.mulf %32, %33 : vector<8x512xf32>
    %35 = arith.addf %29, %34 : vector<8x512xf32>
    %cst_7 = arith.constant dense<0.000000e+00> : vector<512xf32>
    %36 = vector.multi_reduction <add>, %35, %cst_7 [0] : vector<8x512xf32> to vector<512xf32>
    %37 = vector.shape_cast %36 : vector<512xf32> to vector<1x512xf32>
    %38 = arith.mulf %35, %35 : vector<8x512xf32>
    %cst_8 = arith.constant dense<0.000000e+00> : vector<512xf32>
    %39 = vector.multi_reduction <add>, %38, %cst_8 [0] : vector<8x512xf32> to vector<512xf32>
    %40 = vector.shape_cast %39 : vector<512xf32> to vector<1x512xf32>
    %cst_9 = arith.constant 1.250000e-01 : f32
    %41 = vector.broadcast %cst_9 : f32 to vector<1x512xf32>
    %42 = arith.mulf %37, %41 : vector<1x512xf32>
    %cst_10 = arith.constant 1.250000e-01 : f32
    %43 = vector.broadcast %cst_10 : f32 to vector<1x512xf32>
    %44 = arith.mulf %40, %43 : vector<1x512xf32>
    %45 = arith.mulf %42, %42 : vector<1x512xf32>
    %46 = arith.subf %44, %45 : vector<1x512xf32>
    %c0_11 = arith.constant 0 : index
    %c0_12 = arith.constant 0 : index
    %47 = vector.load %arg5[%c0_11, %c0_12] : memref<1x512xf32, #tpu.memory_space<vmem>>, vector<1x512xf32>
    %cst_13 = arith.constant 9.99999974E-6 : f32
    %48 = vector.broadcast %cst_13 : f32 to vector<1x512xf32>
    %49 = arith.addf %46, %48 : vector<1x512xf32>
    %50 = math.rsqrt %49 : vector<1x512xf32>
    %51 = arith.mulf %47, %50 : vector<1x512xf32>
    %c0_14 = arith.constant 0 : index
    %c0_15 = arith.constant 0 : index
    %52 = vector.load %arg6[%c0_14, %c0_15] : memref<1x512xf32, #tpu.memory_space<vmem>>, vector<1x512xf32>
    %53 = arith.mulf %42, %51 : vector<1x512xf32>
    %54 = arith.subf %52, %53 : vector<1x512xf32>
    %55 = vector.broadcast %51 : vector<1x512xf32> to vector<8x512xf32>
    %56 = arith.mulf %35, %55 : vector<8x512xf32>
    %57 = vector.broadcast %54 : vector<1x512xf32> to vector<8x512xf32>
    %58 = arith.addf %56, %57 : vector<8x512xf32>
    %59 = math.tanh %58 : vector<8x512xf32>
    %60 = math.absf %59 : vector<8x512xf32>
    %61 = arith.fptosi %60 : vector<8x512xf32> to vector<8x512xi32>
    %c0_16 = arith.constant 0 : index
    %c0_17 = arith.constant 0 : index
    %62 = vector.load %arg7[%c0_16, %c0_17] : memref<8x512xi32, #tpu.memory_space<vmem>>, vector<8x512xi32>
    tpu.vector_store %arg7[%c0_16, %c0_17], %61 {strides = array<i32>} : memref<8x512xi32, #tpu.memory_space<vmem>>, vector<8x512xi32>,
    return
  }
  func.func @transform_0(%arg0: i32) -> (i32, i32) {
    %c0_i32 = arith.constant 0 : i32
    %c0_i32_0 = arith.constant 0 : i32
    %c0_i32_1 = arith.constant 0 : i32
    return %c0_i32, %c0_i32_0 : i32, i32
  }
  func.func @transform_1(%arg0: i32) -> (i32, i32) {
    %c0_i32 = arith.constant 0 : i32
    %c0_i32_0 = arith.constant 0 : i32
    %c0_i32_1 = arith.constant 0 : i32
    return %c0_i32, %c0_i32_0 : i32, i32
  }
  func.func @transform_2(%arg0: i32) -> (i32, i32) {
    %c0_i32 = arith.constant 0 : i32
    %c0_i32_0 = arith.constant 0 : i32
    %c0_i32_1 = arith.constant 0 : i32
    return %c0_i32, %c0_i32_0 : i32, i32
  }
  func.func @transform_3(%arg0: i32) -> (i32, i32) {
    %c0_i32 = arith.constant 0 : i32
    %c0_i32_0 = arith.constant 0 : i32
    %c0_i32_1 = arith.constant 0 : i32
    return %c0_i32, %c0_i32_0 : i32, i32
  }
  func.func @transform_4(%arg0: i32) -> (i32, i32) {
    %c0_i32 = arith.constant 0 : i32
    %c0_i32_0 = arith.constant 0 : i32
    %c0_i32_1 = arith.constant 0 : i32
    return %c0_i32, %c0_i32_0 : i32, i32
  }
  func.func @transform_5(%arg0: i32) -> (i32, i32) {
    %c0_i32 = arith.constant 0 : i32
    %c0_i32_0 = arith.constant 0 : i32
    %c0_i32_1 = arith.constant 0 : i32
    return %c0_i32, %c0_i32_0 : i32, i32
  }
  func.func @transform_6(%arg0: i32) -> (i32, i32) {
    %c0_i32 = arith.constant 0 : i32
    %c0_i32_0 = arith.constant 0 : i32
    %c0_i32_1 = arith.constant 0 : i32
    return %c0_i32, %c0_i32_0 : i32, i32
  }
}

</mosaic_0001>

<llo_original>
// kernel: generator_noise_proj.1
$region0: #{generator_noise_proj.1}
  #allocation0 [shape = 'u32[]', space=smem, size = 0x4, offset = 0x4, fixed_abs, tag = 'smem constant byte address 0x4 - core index']
  #allocation1 [shape = 'u32[144,128]{1,0:T(1,128)}', space=vmem, size = 0x12000, scoped, tag = 'internal scratch']
  %s0 = inlined_call_operand.hbm [shape: f32[8,256], index: 0, kind: input, shape index: {}]
  %s1 = inlined_call_operand.hbm [shape: f32[8,5], index: 1, kind: input, shape index: {}]
  %s2 = inlined_call_operand.hbm [shape: bf16[256,512], index: 2, kind: input, shape index: {}]
  %s3 = inlined_call_operand.hbm [shape: f32[5,512], index: 3, kind: input, shape index: {}]
  %s4 = inlined_call_operand.vmem [shape: f32[1,512], index: 4, kind: input, shape index: {}]
  %s5 = inlined_call_operand.vmem [shape: f32[1,512], index: 5, kind: input, shape index: {}]
  %s6 = inlined_call_operand.hbm [shape: s32[8,512], index: 6, kind: output, shape index: {}]
  %s7 = sld [smem:[#allocation0]]
  $region50: #{generator_noise_proj.1} parent=0
    _
  %s9 = ssub.s32 1, %s7
  %s10 = scalar_select 0, %s9, %s7
  $region1: #{generator_noise_proj.1} parent=0
    #allocation2 [shape = 'u8[8192]{0}', space=vmem, size = 0x2000, scoped, tag = 'input window, operand 0, single buffered']
    #allocation3 [shape = 's32[1]{0}', space=sflag, size = 0x4, scoped, tag = 'scoped memory for generator_noise_proj.1']
    #allocation4 [shape = 's32[1]{0}', space=sflag, size = 0x4, scoped, tag = 'scoped memory for generator_noise_proj.1']
    #allocation5 [shape = 'u8[4096]{0}', space=vmem, size = 0x1000, scoped, tag = 'input window, operand 1, single buffered']
    #allocation6 [shape = 's32[1]{0}', space=sflag, size = 0x4, scoped, tag = 'scoped memory for generator_noise_proj.1']
    #allocation7 [shape = 'u8[262144]{0}', space=vmem, size = 0x40000, scoped, tag = 'input window, operand 2, single buffered']
    #allocation8 [shape = 'u8[16384]{0}', space=vmem, size = 0x4000, scoped, tag = 'input window, operand 3, single buffered']
    #allocation9 [shape = 's32[1]{0}', space=sflag, size = 0x4, scoped, tag = 'scoped memory for generator_noise_proj.1']
    #allocation10 [shape = 'u8[16384]{0}', space=vmem, size = 0x4000, scoped, tag = 'output window, operand 0, single buffered']
    %11 = vsyncpa [#allocation3], 0
    %12 = vsyncpa [#allocation6], 0
    %13 = vsyncpa [#allocation9], 0
    %14 = vsyncpa [#allocation4], 0
    // Predicated region
    $region2: #{generator_noise_proj.1} parent=1 // pred_check
      _
    $region3: #{generator_noise_proj.1} parent=1 // pred_check_branch
      %16 = sbr.rel (0) target = $region5
    $region4: #{generator_noise_proj.1} parent=1 // pred_region
      %s18 = ssub.s32 256, 256
      %19 = vsyncadd [#allocation3], %s18
      %s21 = sshll.u32 [#allocation2], 4
      %s22 = int_to_ptr.vmem [resolvable:$true] %s21
      %24 = dma.hbm_to_vmem [thread:$0]  %s0, 256, %s22, [#allocation3]
    $region5: #{generator_noise_proj.1} parent=1 // pred_fallthru
      _
    // Predicated region
    $region6: #{generator_noise_proj.1} parent=1 // pred_check
      _
    $region7: #{generator_noise_proj.1} parent=1 // pred_check_branch
      %26 = sbr.rel (0) target = $region9
    $region8: #{generator_noise_proj.1} parent=1 // pred_region
      %s28 = ssub.s32 128, 128
      %29 = vsyncadd [#allocation6], %s28
      %s31 = sshll.u32 [#allocation5], 4
      %s32 = int_to_ptr.vmem [resolvable:$true] %s31
      %34 = dma.hbm_to_vmem [thread:$0]  %s1, 128, %s32, [#allocation6]
    $region9: #{generator_noise_proj.1} parent=1 // pred_fallthru
      _
    // Predicated region
    $region10: #{generator_noise_proj.1} parent=1 // pred_check
      _
    $region11: #{generator_noise_proj.1} parent=1 // pred_check_branch
      %36 = sbr.rel (0) target = $region13
    $region12: #{generator_noise_proj.1} parent=1 // pred_region
      %s38 = ssub.s32 8192, 8192
      %39 = vsyncadd [#allocation6], %s38
      %s40 = sshll.u32 [#allocation7], 4
      %s41 = int_to_ptr.vmem [resolvable:$true] %s40
      %46 = dma.hbm_to_vmem [thread:$0]  %s2, 8192, %s41, [#allocation6], 256, 256, 16
    $region13: #{generator_noise_proj.1} parent=1 // pred_fallthru
      _
    // Predicated region
    $region14: #{generator_noise_proj.1} parent=1 // pred_check
      _
    $region15: #{generator_noise_proj.1} parent=1 // pred_check_branch
      %48 = sbr.rel (0) target = $region17
    $region16: #{generator_noise_proj.1} parent=1 // pred_region
      %s50 = ssub.s32 512, 512
      %51 = vsyncadd [#allocation9], %s50
      %s53 = sshll.u32 [#allocation8], 4
      %s54 = int_to_ptr.vmem [resolvable:$true] %s53
      %56 = dma.hbm_to_vmem [thread:$0]  %s3, 512, %s54, [#allocation9]
    $region17: #{generator_noise_proj.1} parent=1 // pred_fallthru
      _
    // Predicated region
    $region18: #{generator_noise_proj.1} parent=1 // pred_check
      _
    $region19: #{generator_noise_proj.1} parent=1 // pred_check_branch
      %58 = sbr.rel (0) target = $region21
    $region20: #{generator_noise_proj.1} parent=1 // pred_region
      _
    $region21: #{generator_noise_proj.1} parent=1 // pred_fallthru
      _
    // Predicated region
    $region22: #{generator_noise_proj.1} parent=1 // pred_check
      _
    $region23: #{generator_noise_proj.1} parent=1 // pred_check_branch
      %60 = sbr.rel (0) target = $region25
    $region24: #{generator_noise_proj.1} parent=1 // pred_region
      _
    $region25: #{generator_noise_proj.1} parent=1 // pred_fallthru
      _
    // Predicated region
    $region26: #{generator_noise_proj.1} parent=1 // pred_check
      _
    $region27: #{generator_noise_proj.1} parent=1 // pred_check_branch
      %62 = sbr.rel (0) target = $region29
    $region28: #{generator_noise_proj.1} parent=1 // pred_region
      %63 = dma.done [#allocation3], 256
    $region29: #{generator_noise_proj.1} parent=1 // pred_fallthru
      _
    // Predicated region
    $region30: #{generator_noise_proj.1} parent=1 // pred_check
      _
    $region31: #{generator_noise_proj.1} parent=1 // pred_check_branch
      %65 = sbr.rel (0) target = $region33
    $region32: #{generator_noise_proj.1} parent=1 // pred_region
      %66 = dma.done [#allocation6], 128
    $region33: #{generator_noise_proj.1} parent=1 // pred_fallthru
      _
    // Predicated region
    $region34: #{generator_noise_proj.1} parent=1 // pred_check
      _
    $region35: #{generator_noise_proj.1} parent=1 // pred_check_branch
      %68 = sbr.rel (0) target = $region37
    $region36: #{generator_noise_proj.1} parent=1 // pred_region
      %69 = dma.done [#allocation6], 8192
    $region37: #{generator_noise_proj.1} parent=1 // pred_fallthru
      _
    // Predicated region
    $region38: #{generator_noise_proj.1} parent=1 // pred_check
      _
    $region39: #{generator_noise_proj.1} parent=1 // pred_check_branch
      %71 = sbr.rel (0) target = $region41
    $region40: #{generator_noise_proj.1} parent=1 // pred_region
      %72 = dma.done [#allocation9], 512
    $region41: #{generator_noise_proj.1} parent=1 // pred_fallthru
      _
    %v73 = vld [vmem:[#allocation2] sm:$0xff]
    %v74 = vld [vmem:[#allocation2 + $0x8] sm:$0xff]
    %v75 = vpack.c.bf16 %v73, %v73
    %v76 = vpack.c.bf16 %v74, %v74
    %v77 = vld [vmem:[#allocation7] sm:$0xff]
    %v78 = vld [vmem:[#allocation7 + $0x8] sm:$0xff]
    %v79 = vld [vmem:[#allocation7 + $0x10] sm:$0xff]
    %v80 = vld [vmem:[#allocation7 + $0x18] sm:$0xff]
    %v81 = vld [vmem:[#allocation7 + $0x20] sm:$0xff]
    %v82 = vld [vmem:[#allocation7 + $0x28] sm:$0xff]
    %v83 = vld [vmem:[#allocation7 + $0x30] sm:$0xff]
    %v84 = vld [vmem:[#allocation7 + $0x38] sm:$0xff]
    %v85 = vld [vmem:[#allocation7 + $0x40] sm:$0xff]
    %v86 = vld [vmem:[#allocation7 + $0x48] sm:$0xff]
    %v87 = vld [vmem:[#allocation7 + $0x50] sm:$0xff]
    %v88 = vld [vmem:[#allocation7 + $0x58] sm:$0xff]
    %v89 = vld [vmem:[#allocation7 + $0x60] sm:$0xff]
    %v90 = vld [vmem:[#allocation7 + $0x68] sm:$0xff]
    %v91 = vld [vmem:[#allocation7 + $0x70] sm:$0xff]
    %v92 = vld [vmem:[#allocation7 + $0x78] sm:$0xff]
    %v93 = vld [vmem:[#allocation7 + $0x80] sm:$0xff]
    %v94 = vld [vmem:[#allocation7 + $0x88] sm:$0xff]
    %v95 = vld [vmem:[#allocation7 + $0x90] sm:$0xff]
    %v96 = vld [vmem:[#allocation7 + $0x98] sm:$0xff]
    %v97 = vld [vmem:[#allocation7 + $0xa0] sm:$0xff]
    %v98 = vld [vmem:[#allocation7 + $0xa8] sm:$0xff]
    %v99 = vld [vmem:[#allocation7 + $0xb0] sm:$0xff]
    %v100 = vld [vmem:[#allocation7 + $0xb8] sm:$0xff]
    %v101 = vld [vmem:[#allocation7 + $0xc0] sm:$0xff]
    %v102 = vld [vmem:[#allocation7 + $0xc8] sm:$0xff]
    %v103 = vld [vmem:[#allocation7 + $0xd0] sm:$0xff]
    %v104 = vld [vmem:[#allocation7 + $0xd8] sm:$0xff]
    %v105 = vld [vmem:[#allocation7 + $0xe0] sm:$0xff]
    %v106 = vld [vmem:[#allocation7 + $0xe8] sm:$0xff]
    %v107 = vld [vmem:[#allocation7 + $0xf0] sm:$0xff]
    %v108 = vld [vmem:[#allocation7 + $0xf8] sm:$0xff]
    %v109 = vld [vmem:[#allocation7 + $0x100] sm:$0xff]
    %v110 = vld [vmem:[#allocation7 + $0x108] sm:$0xff]
    %v111 = vld [vmem:[#allocation7 + $0x110] sm:$0xff]
    %v112 = vld [vmem:[#allocation7 + $0x118] sm:$0xff]
    %v113 = vld [vmem:[#allocation7 + $0x120] sm:$0xff]
    %v114 = vld [vmem:[#allocation7 + $0x128] sm:$0xff]
    %v115 = vld [vmem:[#allocation7 + $0x130] sm:$0xff]
    %v116 = vld [vmem:[#allocation7 + $0x138] sm:$0xff]
    %v117 = vld [vmem:[#allocation7 + $0x140] sm:$0xff]
    %v118 = vld [vmem:[#allocation7 + $0x148] sm:$0xff]
    %v119 = vld [vmem:[#allocation7 + $0x150] sm:$0xff]
    %v120 = vld [vmem:[#allocation7 + $0x158] sm:$0xff]
    %v121 = vld [vmem:[#allocation7 + $0x160] sm:$0xff]
    %v122 = vld [vmem:[#allocation7 + $0x168] sm:$0xff]
    %v123 = vld [vmem:[#allocation7 + $0x170] sm:$0xff]
    %v124 = vld [vmem:[#allocation7 + $0x178] sm:$0xff]
    %v125 = vld [vmem:[#allocation7 + $0x180] sm:$0xff]
    %v126 = vld [vmem:[#allocation7 + $0x188] sm:$0xff]
    %v127 = vld [vmem:[#allocation7 + $0x190] sm:$0xff]
    %v128 = vld [vmem:[#allocation7 + $0x198] sm:$0xff]
    %v129 = vld [vmem:[#allocation7 + $0x1a0] sm:$0xff]
    %v130 = vld [vmem:[#allocation7 + $0x1a8] sm:$0xff]
    %v131 = vld [vmem:[#allocation7 + $0x1b0] sm:$0xff]
    %v132 = vld [vmem:[#allocation7 + $0x1b8] sm:$0xff]
    %v133 = vld [vmem:[#allocation7 + $0x1c0] sm:$0xff]
    %v134 = vld [vmem:[#allocation7 + $0x1c8] sm:$0xff]
    %v135 = vld [vmem:[#allocation7 + $0x1d0] sm:$0xff]
    %v136 = vld [vmem:[#allocation7 + $0x1d8] sm:$0xff]
    %v137 = vld [vmem:[#allocation7 + $0x1e0] sm:$0xff]
    %v138 = vld [vmem:[#allocation7 + $0x1e8] sm:$0xff]
    %v139 = vld [vmem:[#allocation7 + $0x1f0] sm:$0xff]
    %v140 = vld [vmem:[#allocation7 + $0x1f8] sm:$0xff]
    %v141 = vld [vmem:[#allocation5] sm:$0xff]
    %v142 = vld [vmem:[#allocation8] sm:$0x1f]
    %v143 = vld [vmem:[#allocation8 + $0x8] sm:$0x1f]
    %v144 = vld [vmem:[#allocation8 + $0x10] sm:$0x1f]
    %v145 = vld [vmem:[#allocation8 + $0x18] sm:$0x1f]
    %147 = vset.pattern.permute.xlu0 0
    %148 = vperm.xlu0 %147, %v141
    %v149 = vpop.permute.xlu0 %148
    %v151 = vlaneseq
    %v152 = vshrl.u32 %v151, 7
    %v153 = vsub.s32 0, %v152
    %v154 = vrot.slane %v142, %v153
    %v155 = vlaneseq
    %v156 = vshrl.u32 %v155, 7
    %v157 = vsub.s32 0, %v156
    %v158 = vrot.slane %v143, %v157
    %v159 = vlaneseq
    %v160 = vshrl.u32 %v159, 7
    %v161 = vsub.s32 0, %v160
    %v162 = vrot.slane %v144, %v161
    %v163 = vlaneseq
    %v164 = vshrl.u32 %v163, 7
    %v165 = vsub.s32 0, %v164
    %v166 = vrot.slane %v145, %v165
    %v167 = vmul.f32 %v149, %v154
    %v168 = vmul.f32 %v149, %v158
    %v169 = vmul.f32 %v149, %v162
    %v170 = vmul.f32 %v149, %v166
    %v235 = vunpack.c.l.b16 %v77
    %v236 = vunpack.c.h.b16 %v77
    %v237 = vunpack.c.l.b16 %v78
    %v238 = vunpack.c.h.b16 %v78
    %v239 = vunpack.c.l.b16 %v79
    %v240 = vunpack.c.h.b16 %v79
    %v241 = vunpack.c.l.b16 %v80
    %v242 = vunpack.c.h.b16 %v80
    %v243 = vunpack.c.l.b16 %v81
    %v244 = vunpack.c.h.b16 %v81
    %v245 = vunpack.c.l.b16 %v82
    %v246 = vunpack.c.h.b16 %v82
    %v247 = vunpack.c.l.b16 %v83
    %v248 = vunpack.c.h.b16 %v83
    %v249 = vunpack.c.l.b16 %v84
    %v250 = vunpack.c.h.b16 %v84
    %v251 = vunpack.c.l.b16 %v85
    %v252 = vunpack.c.h.b16 %v85
    %v253 = vunpack.c.l.b16 %v86
    %v254 = vunpack.c.h.b16 %v86
    %v255 = vunpack.c.l.b16 %v87
    %v256 = vunpack.c.h.b16 %v87
    %v257 = vunpack.c.l.b16 %v88
    %v258 = vunpack.c.h.b16 %v88
    %v259 = vunpack.c.l.b16 %v89
    %v260 = vunpack.c.h.b16 %v89
    %v261 = vunpack.c.l.b16 %v90
    %v262 = vunpack.c.h.b16 %v90
    %v263 = vunpack.c.l.b16 %v91
    %v264 = vunpack.c.h.b16 %v91
    %v265 = vunpack.c.l.b16 %v92
    %v266 = vunpack.c.h.b16 %v92
    %v267 = vunpack.c.l.b16 %v93
    %v268 = vunpack.c.h.b16 %v93
    %v269 = vunpack.c.l.b16 %v94
    %v270 = vunpack.c.h.b16 %v94
    %v271 = vunpack.c.l.b16 %v95
    %v272 = vunpack.c.h.b16 %v95
    %v273 = vunpack.c.l.b16 %v96
    %v274 = vunpack.c.h.b16 %v96
    %v275 = vunpack.c.l.b16 %v97
    %v276 = vunpack.c.h.b16 %v97
    %v277 = vunpack.c.l.b16 %v98
    %v278 = vunpack.c.h.b16 %v98
    %v279 = vunpack.c.l.b16 %v99
    %v280 = vunpack.c.h.b16 %v99
    %v281 = vunpack.c.l.b16 %v100
    %v282 = vunpack.c.h.b16 %v100
    %v283 = vunpack.c.l.b16 %v101
    %v284 = vunpack.c.h.b16 %v101
    %v285 = vunpack.c.l.b16 %v102
    %v286 = vunpack.c.h.b16 %v102
    %v287 = vunpack.c.l.b16 %v103
    %v288 = vunpack.c.h.b16 %v103
    %v289 = vunpack.c.l.b16 %v104
    %v290 = vunpack.c.h.b16 %v104
    %v291 = vunpack.c.l.b16 %v105
    %v292 = vunpack.c.h.b16 %v105
    %v293 = vunpack.c.l.b16 %v106
    %v294 = vunpack.c.h.b16 %v106
    %v295 = vunpack.c.l.b16 %v107
    %v296 = vunpack.c.h.b16 %v107
    %v297 = vunpack.c.l.b16 %v108
    %v298 = vunpack.c.h.b16 %v108
    %v299 = vunpack.c.l.b16 %v109
    %v300 = vunpack.c.h.b16 %v109
    %v301 = vunpack.c.l.b16 %v110
    %v302 = vunpack.c.h.b16 %v110
    %v303 = vunpack.c.l.b16 %v111
    %v304 = vunpack.c.h.b16 %v111
    %v305 = vunpack.c.l.b16 %v112
    %v306 = vunpack.c.h.b16 %v112
    %v307 = vunpack.c.l.b16 %v113
    %v308 = vunpack.c.h.b16 %v113
    %v309 = vunpack.c.l.b16 %v114
    %v310 = vunpack.c.h.b16 %v114
    %v311 = vunpack.c.l.b16 %v115
    %v312 = vunpack.c.h.b16 %v115
    %v313 = vunpack.c.l.b16 %v116
    %v314 = vunpack.c.h.b16 %v116
    %v315 = vunpack.c.l.b16 %v117
    %v316 = vunpack.c.h.b16 %v117
    %v317 = vunpack.c.l.b16 %v118
    %v318 = vunpack.c.h.b16 %v118
    %v319 = vunpack.c.l.b16 %v119
    %v320 = vunpack.c.h.b16 %v119
    %v321 = vunpack.c.l.b16 %v120
    %v322 = vunpack.c.h.b16 %v120
    %v323 = vunpack.c.l.b16 %v121
    %v324 = vunpack.c.h.b16 %v121
    %v325 = vunpack.c.l.b16 %v122
    %v326 = vunpack.c.h.b16 %v122
    %v327 = vunpack.c.l.b16 %v123
    %v328 = vunpack.c.h.b16 %v123
    %v329 = vunpack.c.l.b16 %v124
    %v330 = vunpack.c.h.b16 %v124
    %v331 = vunpack.c.l.b16 %v125
    %v332 = vunpack.c.h.b16 %v125
    %v333 = vunpack.c.l.b16 %v126
    %v334 = vunpack.c.h.b16 %v126
    %v335 = vunpack.c.l.b16 %v127
    %v336 = vunpack.c.h.b16 %v127
    %v337 = vunpack.c.l.b16 %v128
    %v338 = vunpack.c.h.b16 %v128
    %v339 = vunpack.c.l.b16 %v129
    %v340 = vunpack.c.h.b16 %v129
    %v341 = vunpack.c.l.b16 %v130
    %v342 = vunpack.c.h.b16 %v130
    %v343 = vunpack.c.l.b16 %v131
    %v344 = vunpack.c.h.b16 %v131
    %v345 = vunpack.c.l.b16 %v132
    %v346 = vunpack.c.h.b16 %v132
    %v347 = vunpack.c.l.b16 %v133
    %v348 = vunpack.c.h.b16 %v133
    %v349 = vunpack.c.l.b16 %v134
    %v350 = vunpack.c.h.b16 %v134
    %v351 = vunpack.c.l.b16 %v135
    %v352 = vunpack.c.h.b16 %v135
    %v353 = vunpack.c.l.b16 %v136
    %v354 = vunpack.c.h.b16 %v136
    %v355 = vunpack.c.l.b16 %v137
    %v356 = vunpack.c.h.b16 %v137
    %v357 = vunpack.c.l.b16 %v138
    %v358 = vunpack.c.h.b16 %v138
    %v359 = vunpack.c.l.b16 %v139
    %v360 = vunpack.c.h.b16 %v139
    %v361 = vunpack.c.l.b16 %v140
    %v362 = vunpack.c.h.b16 %v140
    %v363 = vpack.c.b16 %v239, %v235
    %v364 = vpack.c.b16 %v240, %v236
    %v365 = vpack.c.b16 %v241, %v237
    %v366 = vpack.c.b16 %v242, %v238
    %v367 = vpack.c.b16 %v247, %v243
    %v368 = vpack.c.b16 %v248, %v244
    %v369 = vpack.c.b16 %v249, %v245
    %v370 = vpack.c.b16 %v250, %v246
    %v371 = vpack.c.b16 %v255, %v251
    %v372 = vpack.c.b16 %v256, %v252
    %v373 = vpack.c.b16 %v257, %v253
    %v374 = vpack.c.b16 %v258, %v254
    %v375 = vpack.c.b16 %v263, %v259
    %v376 = vpack.c.b16 %v264, %v260
    %v377 = vpack.c.b16 %v265, %v261
    %v378 = vpack.c.b16 %v266, %v262
    %v379 = vpack.c.b16 %v271, %v267
    %v380 = vpack.c.b16 %v272, %v268
    %v381 = vpack.c.b16 %v273, %v269
    %v382 = vpack.c.b16 %v274, %v270
    %v383 = vpack.c.b16 %v279, %v275
    %v384 = vpack.c.b16 %v280, %v276
    %v385 = vpack.c.b16 %v281, %v277
    %v386 = vpack.c.b16 %v282, %v278
    %v387 = vpack.c.b16 %v287, %v283
    %v388 = vpack.c.b16 %v288, %v284
    %v389 = vpack.c.b16 %v289, %v285
    %v390 = vpack.c.b16 %v290, %v286
    %v391 = vpack.c.b16 %v295, %v291
    %v392 = vpack.c.b16 %v296, %v292
    %v393 = vpack.c.b16 %v297, %v293
    %v394 = vpack.c.b16 %v298, %v294
    %v395 = vpack.c.b16 %v303, %v299
    %v396 = vpack.c.b16 %v304, %v300
    %v397 = vpack.c.b16 %v305, %v301
    %v398 = vpack.c.b16 %v306, %v302
    %v399 = vpack.c.b16 %v311, %v307
    %v400 = vpack.c.b16 %v312, %v308
    %v401 = vpack.c.b16 %v313, %v309
    %v402 = vpack.c.b16 %v314, %v310
    %v403 = vpack.c.b16 %v319, %v315
    %v404 = vpack.c.b16 %v320, %v316
    %v405 = vpack.c.b16 %v321, %v317
    %v406 = vpack.c.b16 %v322, %v318
    %v407 = vpack.c.b16 %v327, %v323
    %v408 = vpack.c.b16 %v328, %v324
    %v409 = vpack.c.b16 %v329, %v325
    %v410 = vpack.c.b16 %v330, %v326
    %v411 = vpack.c.b16 %v335, %v331
    %v412 = vpack.c.b16 %v336, %v332
    %v413 = vpack.c.b16 %v337, %v333
    %v414 = vpack.c.b16 %v338, %v334
    %v415 = vpack.c.b16 %v343, %v339
    %v416 = vpack.c.b16 %v344, %v340
    %v417 = vpack.c.b16 %v345, %v341
    %v418 = vpack.c.b16 %v346, %v342
    %v419 = vpack.c.b16 %v351, %v347
    %v420 = vpack.c.b16 %v352, %v348
    %v421 = vpack.c.b16 %v353, %v349
    %v422 = vpack.c.b16 %v354, %v350
    %v423 = vpack.c.b16 %v359, %v355
    %v424 = vpack.c.b16 %v360, %v356
    %v425 = vpack.c.b16 %v361, %v357
    %v426 = vpack.c.b16 %v362, %v358
    %491 = vmatprep.subr.bf16.mxu0 %v364
    %492 = vmatpush1.bf16.msra.mxu0 %v363
    %493 = vmatprep.subr.bf16.mxu0 %v368
    %494 = vmatpush1.bf16.msra.mxu0 %v367
    %495 = vmatprep.subr.bf16.mxu0 %v372
    %496 = vmatpush1.bf16.msra.mxu0 %v371
    %497 = vmatprep.subr.bf16.mxu0 %v376
    %498 = vmatpush1.bf16.msra.mxu0 %v375
    %499 = vmatprep.subr.bf16.mxu0 %v380
    %500 = vmatpush1.bf16.msra.mxu0 %v379
    %501 = vmatprep.subr.bf16.mxu0 %v384
    %502 = vmatpush1.bf16.msra.mxu0 %v383
    %503 = vmatprep.subr.bf16.mxu0 %v388
    %504 = vmatpush1.bf16.msra.mxu0 %v387
    %505 = vmatprep.subr.bf16.mxu0 %v392
    %506 = vmatpush1.bf16.msra.mxu0 %v391
    %507 = vmatprep.subr.bf16.mxu0 %v396
    %508 = vmatpush1.bf16.msra.mxu0 %v395
    %509 = vmatprep.subr.bf16.mxu0 %v400
    %510 = vmatpush1.bf16.msra.mxu0 %v399
    %511 = vmatprep.subr.bf16.mxu0 %v404
    %512 = vmatpush1.bf16.msra.mxu0 %v403
    %513 = vmatprep.subr.bf16.mxu0 %v408
    %514 = vmatpush1.bf16.msra.mxu0 %v407
    %515 = vmatprep.subr.bf16.mxu0 %v412
    %516 = vmatpush1.bf16.msra.mxu0 %v411
    %517 = vmatprep.subr.bf16.mxu0 %v416
    %518 = vmatpush1.bf16.msra.mxu0 %v415
    %519 = vmatprep.subr.bf16.mxu0 %v420
    %520 = vmatpush1.bf16.msra.mxu0 %v419
    %521 = vmatprep.subr.bf16.mxu0 %v424
    %522 = vmatpush1.bf16.msra.mxu0 %v423
    %523 = vmatprep.mubr.bf16.mxu0 %v76
    %524 = vmatmul.mubr.bf16.gmra.mrb[0].mxu0 %v75
    %v525 = vpop.f32.mrb[0].mxu0
    %v526 = vadd.f32 %v167, %v525
    %v527 = vpop.f32.mrb[0].mxu0
    %v528 = vadd.f32 %v168, %v527
    %v529 = vpop.f32.mrb[0].mxu0
    %v530 = vpop.f32.mrb[0].mxu0
    %531 = vdwg.mxu0
    %532 = vmatprep.subr.bf16.mxu0 %v366
    %533 = vmatpush1.bf16.msra.mxu0 %v365
    %534 = vmatprep.subr.bf16.mxu0 %v370
    %535 = vmatpush1.bf16.msra.mxu0 %v369
    %536 = vmatprep.subr.bf16.mxu0 %v374
    %537 = vmatpush1.bf16.msra.mxu0 %v373
    %538 = vmatprep.subr.bf16.mxu0 %v378
    %539 = vmatpush1.bf16.msra.mxu0 %v377
    %540 = vmatprep.subr.bf16.mxu0 %v382
    %541 = vmatpush1.bf16.msra.mxu0 %v381
    %542 = vmatprep.subr.bf16.mxu0 %v386
    %543 = vmatpush1.bf16.msra.mxu0 %v385
    %544 = vmatprep.subr.bf16.mxu0 %v390
    %545 = vmatpush1.bf16.msra.mxu0 %v389
    %546 = vmatprep.subr.bf16.mxu0 %v394
    %547 = vmatpush1.bf16.msra.mxu0 %v393
    %548 = vmatprep.subr.bf16.mxu0 %v398
    %549 = vmatpush1.bf16.msra.mxu0 %v397
    %550 = vmatprep.subr.bf16.mxu0 %v402
    %551 = vmatpush1.bf16.msra.mxu0 %v401
    %552 = vmatprep.subr.bf16.mxu0 %v406
    %553 = vmatpush1.bf16.msra.mxu0 %v405
    %554 = vmatprep.subr.bf16.mxu0 %v410
    %555 = vmatpush1.bf16.msra.mxu0 %v409
    %556 = vmatprep.subr.bf16.mxu0 %v414
    %557 = vmatpush1.bf16.msra.mxu0 %v413
    %558 = vmatprep.subr.bf16.mxu0 %v418
    %559 = vmatpush1.bf16.msra.mxu0 %v417
    %560 = vmatprep.subr.bf16.mxu0 %v422
    %561 = vmatpush1.bf16.msra.mxu0 %v421
    %562 = vmatprep.subr.bf16.mxu0 %v426
    %563 = vmatpush1.bf16.msra.mxu0 %v425
    %564 = vmatprep.mubr.bf16.mxu0 %v76
    %565 = vmatmul.mubr.bf16.gmra.mrb[0].mxu0 %v75
    %v566 = vpop.f32.mrb[0].mxu0
    %v567 = vadd.f32 %v169, %v566
    %v568 = vpop.f32.mrb[0].mxu0
    %v569 = vadd.f32 %v170, %v568
    %v570 = vpop.f32.mrb[0].mxu0
    %v571 = vpop.f32.mrb[0].mxu0
    %572 = vdwg.mxu0
    %573 = vset.pattern.permute.xlu0 1
    %574 = vperm.xlu0 %573, %v141
    %v575 = vpop.permute.xlu0 %574
    %v577 = vlaneseq
    %v578 = vshrl.u32 %v577, 7
    %v579 = vsub.s32 1, %v578
    %v580 = vrot.slane %v142, %v579
    %v581 = vlaneseq
    %v582 = vshrl.u32 %v581, 7
    %v583 = vsub.s32 1, %v582
    %v584 = vrot.slane %v143, %v583
    %v585 = vlaneseq
    %v586 = vshrl.u32 %v585, 7
    %v587 = vsub.s32 1, %v586
    %v588 = vrot.slane %v144, %v587
    %v589 = vlaneseq
    %v590 = vshrl.u32 %v589, 7
    %v591 = vsub.s32 1, %v590
    %v592 = vrot.slane %v145, %v591
    %v593 = vmul.f32 %v575, %v580
    %v594 = vmul.f32 %v575, %v584
    %v595 = vmul.f32 %v575, %v588
    %v596 = vmul.f32 %v575, %v592
    %v597 = vadd.f32 %v526, %v593
    %v598 = vadd.f32 %v528, %v594
    %v599 = vadd.f32 %v567, %v595
    %v600 = vadd.f32 %v569, %v596
    %601 = vset.pattern.permute.xlu0 2
    %602 = vperm.xlu0 %601, %v141
    %v603 = vpop.permute.xlu0 %602
    %v605 = vlaneseq
    %v606 = vshrl.u32 %v605, 7
    %v607 = vsub.s32 2, %v606
    %v608 = vrot.slane %v142, %v607
    %v609 = vlaneseq
    %v610 = vshrl.u32 %v609, 7
    %v611 = vsub.s32 2, %v610
    %v612 = vrot.slane %v143, %v611
    %v613 = vlaneseq
    %v614 = vshrl.u32 %v613, 7
    %v615 = vsub.s32 2, %v614
    %v616 = vrot.slane %v144, %v615
    %v617 = vlaneseq
    %v618 = vshrl.u32 %v617, 7
    %v619 = vsub.s32 2, %v618
    %v620 = vrot.slane %v145, %v619
    %v621 = vmul.f32 %v603, %v608
    %v622 = vmul.f32 %v603, %v612
    %v623 = vmul.f32 %v603, %v616
    %v624 = vmul.f32 %v603, %v620
    %v625 = vadd.f32 %v597, %v621
    %v626 = vadd.f32 %v598, %v622
    %v627 = vadd.f32 %v599, %v623
    %v628 = vadd.f32 %v600, %v624
    %629 = vset.pattern.permute.xlu0 3
    %630 = vperm.xlu0 %629, %v141
    %v631 = vpop.permute.xlu0 %630
    %v633 = vlaneseq
    %v634 = vshrl.u32 %v633, 7
    %v635 = vsub.s32 3, %v634
    %v636 = vrot.slane %v142, %v635
    %v637 = vlaneseq
    %v638 = vshrl.u32 %v637, 7
    %v639 = vsub.s32 3, %v638
    %v640 = vrot.slane %v143, %v639
    %v641 = vlaneseq
    %v642 = vshrl.u32 %v641, 7
    %v643 = vsub.s32 3, %v642
    %v644 = vrot.slane %v144, %v643
    %v645 = vlaneseq
    %v646 = vshrl.u32 %v645, 7
    %v647 = vsub.s32 3, %v646
    %v648 = vrot.slane %v145, %v647
    %v649 = vmul.f32 %v631, %v636
    %v650 = vmul.f32 %v631, %v640
    %v651 = vmul.f32 %v631, %v644
    %v652 = vmul.f32 %v631, %v648
    %v653 = vadd.f32 %v625, %v649
    %v654 = vadd.f32 %v626, %v650
    %v655 = vadd.f32 %v627, %v651
    %v656 = vadd.f32 %v628, %v652
    %657 = vset.pattern.permute.xlu0 4
    %658 = vperm.xlu0 %657, %v141
    %v659 = vpop.permute.xlu0 %658
    %v661 = vlaneseq
    %v662 = vshrl.u32 %v661, 7
    %v663 = vsub.s32 4, %v662
    %v664 = vrot.slane %v142, %v663
    %v665 = vlaneseq
    %v666 = vshrl.u32 %v665, 7
    %v667 = vsub.s32 4, %v666
    %v668 = vrot.slane %v143, %v667
    %v669 = vlaneseq
    %v670 = vshrl.u32 %v669, 7
    %v671 = vsub.s32 4, %v670
    %v672 = vrot.slane %v144, %v671
    %v673 = vlaneseq
    %v674 = vshrl.u32 %v673, 7
    %v675 = vsub.s32 4, %v674
    %v676 = vrot.slane %v145, %v675
    %v677 = vmul.f32 %v659, %v664
    %v678 = vmul.f32 %v659, %v668
    %v679 = vmul.f32 %v659, %v672
    %v680 = vmul.f32 %v659, %v676
    %v681 = vadd.f32 %v653, %v677
    %v682 = vadd.f32 %v654, %v678
    %v683 = vadd.f32 %v655, %v679
    %v684 = vadd.f32 %v656, %v680
    %v685 = vrot.slane %v681, 4
    %v686 = vadd.f32 %v681, %v685
    %v687 = vrot.slane %v686, 2
    %v688 = vadd.f32 %v686, %v687
    %v689 = vrot.slane %v688, 1
    %v690 = vadd.f32 %v688, %v689
    %v691 = vrot.slane %v682, 4
    %v692 = vadd.f32 %v682, %v691
    %v693 = vrot.slane %v692, 2
    %v694 = vadd.f32 %v692, %v693
    %v695 = vrot.slane %v694, 1
    %v696 = vadd.f32 %v694, %v695
    %v697 = vrot.slane %v683, 4
    %v698 = vadd.f32 %v683, %v697
    %v699 = vrot.slane %v698, 2
    %v700 = vadd.f32 %v698, %v699
    %v701 = vrot.slane %v700, 1
    %v702 = vadd.f32 %v700, %v701
    %v703 = vrot.slane %v684, 4
    %v704 = vadd.f32 %v684, %v703
    %v705 = vrot.slane %v704, 2
    %v706 = vadd.f32 %v704, %v705
    %v707 = vrot.slane %v706, 1
    %v708 = vadd.f32 %v706, %v707
    %v709 = vmul.f32 %v681, %v681
    %v710 = vmul.f32 %v682, %v682
    %v711 = vmul.f32 %v683, %v683
    %v712 = vmul.f32 %v684, %v684
    %v713 = vrot.slane %v709, 4
    %v714 = vadd.f32 %v709, %v713
    %v715 = vrot.slane %v714, 2
    %v716 = vadd.f32 %v714, %v715
    %v717 = vrot.slane %v716, 1
    %v718 = vadd.f32 %v716, %v717
    %v719 = vrot.slane %v710, 4
    %v720 = vadd.f32 %v710, %v719
    %v721 = vrot.slane %v720, 2
    %v722 = vadd.f32 %v720, %v721
    %v723 = vrot.slane %v722, 1
    %v724 = vadd.f32 %v722, %v723
    %v725 = vrot.slane %v711, 4
    %v726 = vadd.f32 %v711, %v725
    %v727 = vrot.slane %v726, 2
    %v728 = vadd.f32 %v726, %v727
    %v729 = vrot.slane %v728, 1
    %v730 = vadd.f32 %v728, %v729
    %v731 = vrot.slane %v712, 4
    %v732 = vadd.f32 %v712, %v731
    %v733 = vrot.slane %v732, 2
    %v734 = vadd.f32 %v732, %v733
    %v735 = vrot.slane %v734, 1
    %v736 = vadd.f32 %v734, %v735
    %v737 = vmul.f32 %v690, 0.125
    %v738 = vmul.f32 %v696, 0.125
    %v739 = vmul.f32 %v702, 0.125
    %v740 = vmul.f32 %v708, 0.125
    %v741 = vmul.f32 %v718, 0.125
    %v742 = vmul.f32 %v724, 0.125
    %v743 = vmul.f32 %v730, 0.125
    %v744 = vmul.f32 %v736, 0.125
    %v745 = vmul.f32 %v737, %v737
    %v746 = vmul.f32 %v738, %v738
    %v747 = vmul.f32 %v739, %v739
    %v748 = vmul.f32 %v740, %v740
    %v749 = vsub.f32 %v741, %v745
    %v750 = vsub.f32 %v742, %v746
    %v751 = vsub.f32 %v743, %v747
    %v752 = vsub.f32 %v744, %v748
    %v753 = vld [vmem:[%s4] sm:$0xf]
    %v754 = vadd.f32 %v749, 1e-05
    %v755 = vadd.f32 %v750, 1e-05
    %v756 = vadd.f32 %v751, 1e-05
    %v757 = vadd.f32 %v752, 1e-05
    %v758 = vrsqrt.pop %v754
    %v759 = vrsqrt.pop %v755
    %v760 = vrsqrt.pop %v756
    %v761 = vrsqrt.pop %v757
    %v766 = vcombine.low %v758, %v759
    %v767 = vcombine.low %v760, %v761
    %v769 = vunpack.c.l.s4 1966171168
    %v770 = vunpack.c.0.s8 %v769
    %v771 = vlaneseq
    %v772 = vshrl.u32 %v771, 7
    %v773 = vsub.s32 %v770, %v772
    %v774 = vrot.slane %v766, %v773
    %v776 = vunpack.c.l.s4 1966171168
    %v777 = vunpack.c.0.s8 %v776
    %v778 = vlaneseq
    %v779 = vshrl.u32 %v778, 7
    %v780 = vsub.s32 %v777, %v779
    %v781 = vrot.slane %v767, %v780
    %v782 = vcombine.low %v774, %v781
    %v784 = vunpack.c.l.s4 1966171168
    %v785 = vunpack.c.0.s8 %v784
    %v786 = vlaneseq
    %v787 = vshrl.u32 %v786, 7
    %v788 = vsub.s32 %v785, %v787
    %v789 = vrot.slane %v782, %v788
    %v791 = vmul.f32 %v753, %v789
    %v792 = vld [vmem:[%s5] sm:$0xf]
    %v794 = vlaneseq
    %v795 = vshrl.u32 %v794, 7
    %v796 = vsub.s32 0, %v795
    %v797 = vrot.slane %v791, %v796
    %v798 = vlaneseq
    %v799 = vshrl.u32 %v798, 7
    %v800 = vsub.s32 1, %v799
    %v801 = vrot.slane %v791, %v800
    %v802 = vlaneseq
    %v803 = vshrl.u32 %v802, 7
    %v804 = vsub.s32 2, %v803
    %v805 = vrot.slane %v791, %v804
    %v806 = vlaneseq
    %v807 = vshrl.u32 %v806, 7
    %v808 = vsub.s32 3, %v807
    %v809 = vrot.slane %v791, %v808
    %v814 = vmul.f32 %v737, %v797
    %v815 = vmul.f32 %v738, %v801
    %v816 = vmul.f32 %v739, %v805
    %v817 = vmul.f32 %v740, %v809
    %v822 = vcombine.low %v814, %v815
    %v823 = vcombine.low %v816, %v817
    %v825 = vunpack.c.l.s4 1966171168
    %v826 = vunpack.c.0.s8 %v825
    %v827 = vlaneseq
    %v828 = vshrl.u32 %v827, 7
    %v829 = vsub.s32 %v826, %v828
    %v830 = vrot.slane %v822, %v829
    %v832 = vunpack.c.l.s4 1966171168
    %v833 = vunpack.c.0.s8 %v832
    %v834 = vlaneseq
    %v835 = vshrl.u32 %v834, 7
    %v836 = vsub.s32 %v833, %v835
    %v837 = vrot.slane %v823, %v836
    %v838 = vcombine.low %v830, %v837
    %v840 = vunpack.c.l.s4 1966171168
    %v841 = vunpack.c.0.s8 %v840
    %v842 = vlaneseq
    %v843 = vshrl.u32 %v842, 7
    %v844 = vsub.s32 %v841, %v843
    %v845 = vrot.slane %v838, %v844
    %v847 = vsub.f32 %v792, %v845
    %v848 = vmul.f32 %v681, %v797
    %v849 = vmul.f32 %v682, %v801
    %v850 = vmul.f32 %v683, %v805
    %v851 = vmul.f32 %v684, %v809
    %v853 = vlaneseq
    %v854 = vshrl.u32 %v853, 7
    %v855 = vsub.s32 0, %v854
    %v856 = vrot.slane %v847, %v855
    %v857 = vlaneseq
    %v858 = vshrl.u32 %v857, 7
    %v859 = vsub.s32 1, %v858
    %v860 = vrot.slane %v847, %v859
    %v861 = vlaneseq
    %v862 = vshrl.u32 %v861, 7
    %v863 = vsub.s32 2, %v862
    %v864 = vrot.slane %v847, %v863
    %v865 = vlaneseq
    %v866 = vshrl.u32 %v865, 7
    %v867 = vsub.s32 3, %v866
    %v868 = vrot.slane %v847, %v867
    %v873 = vadd.f32 %v848, %v856
    %v874 = vadd.f32 %v849, %v860
    %v875 = vadd.f32 %v850, %v864
    %v876 = vadd.f32 %v851, %v868
    %v877 = vtanh.pop %v873
    %v878 = vtanh.pop %v874
    %v879 = vtanh.pop %v875
    %v880 = vtanh.pop %v876
    %v881 = vand.u32 2147483647, %v877
    %v882 = vand.u32 2147483647, %v878
    %v883 = vand.u32 2147483647, %v879
    %v884 = vand.u32 2147483647, %v880
    %v885 = vcvt.f32.s32.to.zero.pseudo %v881
    %v886 = vcvt.f32.s32.to.zero.pseudo %v882
    %v887 = vcvt.f32.s32.to.zero.pseudo %v883
    %v888 = vcvt.f32.s32.to.zero.pseudo %v884
    %889 = vst [vmem:[#allocation10] sm:$0xff] %v885
    %890 = vst [vmem:[#allocation10 + $0x8] sm:$0xff] %v886
    %891 = vst [vmem:[#allocation10 + $0x10] sm:$0xff] %v887
    %892 = vst [vmem:[#allocation10 + $0x18] sm:$0xff] %v888
    // Predicated region
    $region42: #{generator_noise_proj.1} parent=1 // pred_check
      _
    $region43: #{generator_noise_proj.1} parent=1 // pred_check_branch
      %894 = sbr.rel (0) target = $region45
    $region44: #{generator_noise_proj.1} parent=1 // pred_region
      %s896 = ssub.s32 512, 512
      %897 = vsyncadd [#allocation4], %s896
      %s899 = sshll.u32 [#allocation10], 4
      %s900 = int_to_ptr.vmem [resolvable:$true] %s899
      %902 = dma.vmem_to_hbm [thread:$0]  %s900, 512, %s6, [#allocation4]
    $region45: #{generator_noise_proj.1} parent=1 // pred_fallthru
      _
    // Predicated region
    $region46: #{generator_noise_proj.1} parent=1 // pred_check
      _
    $region47: #{generator_noise_proj.1} parent=1 // pred_check_branch
      %904 = sbr.rel (0) target = $region49
    $region48: #{generator_noise_proj.1} parent=1 // pred_region
      %905 = dma.done [#allocation4], 512
    $region49: #{generator_noise_proj.1} parent=1 // pred_fallthru
      _
    %906 = vsyncpa [#allocation3], 1
    %907 = vsyncpa [#allocation6], 1
    %908 = vsyncpa [#allocation9], 1
    %909 = vsyncpa [#allocation4], 1

</llo_original>
